<compile_context>
chip_gen: v5e
topology: v5e:2x2
jax: 0.10.0
libtpu: 0.0.40
codegen_flags: <defaults>
</compile_context>

<pallas_src>
import functools

import numpy as np
import jax
import jax.numpy as jnp
from jax.experimental import pallas as pl
from jax.experimental.pallas import tpu as pltpu

THRESHOLD = 4.0                    # matches boundary_jiscore(threshold=4)
_T2 = float(THRESHOLD * THRESHOLD)
_BIG = 1.0e30
_TN_MAX = 256                      # contour rows per tile
_TM_MAX = 2048                     # point columns per tile (2 MiB f32 d2 tile)


def _tp_kernel(nc_ref, c_ref, p_ref, o_ref, minsq_ref):
    """Tiled online row-min of squared distances + clamped score sum."""
    # Read grid position / extent ONCE at the top level of the kernel body.
    # (pl.program_id inside a pl.when body ends up inside a lax.cond sub-jaxpr
    #  and fails to lower on the interpret/CPU path.)
    i = pl.program_id(0)
    k = pl.program_id(1)
    k_last = pl.num_programs(1) - 1
    tn = c_ref.shape[0]
    row_offset = i * tn

    @pl.when(k == 0)
    def _init():
        minsq_ref[...] = jnp.full(minsq_ref.shape, _BIG, minsq_ref.dtype)

    c = c_ref[...]                                     # (TN, 2) centered coords
    p = p_ref[...]                                     # (2, TM)
    c2 = jnp.sum(c * c, axis=1, keepdims=True)         # (TN, 1)
    p2 = jnp.sum(p * p, axis=0, keepdims=True)         # (1, TM)
    # cross term on the MXU; -2 folded into the LHS.  HIGHEST keeps f32 accuracy.
    cross = jnp.dot(c * (-2.0), p,
                    preferred_element_type=jnp.float32,
                    precision=jax.lax.Precision.HIGHEST)   # (TN, TM)
    d2 = (c2 + p2) + cross                             # squared distances
    tile_min = jnp.min(d2, axis=1, keepdims=True)      # (TN, 1)
    minsq_ref[...] = jnp.minimum(minsq_ref[...], tile_min)

    @pl.when(k == k_last)
    def _finalize():
        d2min = jnp.clip(minsq_ref[...], 0.0, _T2)     # clamp in squared space
        score = 1.0 - d2min * (1.0 / _T2)              # (TN, 1)
        rows = (jax.lax.broadcasted_iota(jnp.int32, (tn, 1), 0) + row_offset)
        score = jnp.where(rows < nc_ref[0], score, 0.0)    # mask padded rows
        psum = jnp.sum(score)
        rid = jax.lax.broadcasted_iota(jnp.int32, (8, 128), 0)
        lid = jax.lax.broadcasted_iota(jnp.int32, (8, 128), 1)
        o_ref[...] = jnp.where((rid == 0) & (lid == 0), psum, 0.0)[None]


@functools.lru_cache(maxsize=None)
def _build_tp_fn(n_pad, m_pad, tn, tm):
    grid = (n_pad // tn, m_pad // tm)
    grid_spec = pltpu.PrefetchScalarGridSpec(
        num_scalar_prefetch=1,
        grid=grid,
        in_specs=[
            pl.BlockSpec((tn, 2), lambda i, k, nc: (i, 0)),   # contours
            pl.BlockSpec((2, tm), lambda i, k, nc: (0, k)),   # points
        ],
        out_specs=pl.BlockSpec((1, 8, 128), lambda i, k, nc: (i, 0, 0)),
        scratch_shapes=[pltpu.VMEM((tn, 1), jnp.float32)],
    )
    call = pl.pallas_call(
        _tp_kernel,
        out_shape=jax.ShapeDtypeStruct((grid[0], 8, 128), jnp.float32),
        grid_spec=grid_spec,
        compiler_params=pltpu.CompilerParams(
            dimension_semantics=("parallel", "arbitrary"),
            vmem_limit_bytes=32 * 1024 * 1024,
        ),
    )
    return jax.jit(lambda nc, c, p: jnp.sum(call(nc, c, p)))


def get_tp(contours, points):
    """Pallas version of boundary_jiscore.get_TP (threshold baked to 4)."""
    contours = np.asarray(contours, np.float32)        # (Nc, 2)
    points = np.asarray(points, np.float32)            # (Np, 2)
    nc, npts = contours.shape[0], points.shape[0]

    # Centering is distance-invariant; it keeps |coords| small so the
    # |c|^2 + |p|^2 - 2 c.p cancellation stays accurate in f32.
    lo = np.minimum(contours.min(0), points.min(0))
    hi = np.maximum(contours.max(0), points.max(0))
    center = (0.5 * (lo + hi)).astype(np.float32)
    c = contours - center
    p = points - center

    # Bucket padded sizes to powers of two so the compiled kernel is reused.
    n_pad = max(8, int(pl.next_power_of_2(nc)))
    m_pad = max(128, int(pl.next_power_of_2(npts)))
    tn = min(_TN_MAX, n_pad)
    tm = min(_TM_MAX, m_pad)

    c_pad = np.empty((n_pad, 2), np.float32)
    c_pad[:nc] = c
    c_pad[nc:] = c[0]          # padded contour rows are masked in-kernel
    p_pad = np.empty((m_pad, 2), np.float32)
    p_pad[:npts] = p
    p_pad[npts:] = p[0]        # duplicated points never change the min distance

    fn = _build_tp_fn(n_pad, m_pad, tn, tm)
    return fn(jnp.asarray([nc], jnp.int32),
              jnp.asarray(c_pad),
              jnp.asarray(np.ascontiguousarray(p_pad.T)))


def _boundary_points(img):
    # TODO(synk): cv2.findContours (CHAIN_APPROX_NONE, (x,y) ordering) has no
    # Pallas/JAX equivalent; use a 4-neighbor morphological boundary instead.
    fg = img == 255
    padded = np.pad(fg, 1, constant_values=False)
    interior = (
        padded[:-2, 1:-1] & padded[2:, 1:-1] & padded[1:-1, :-2] & padded[1:-1, 2:]
    )
    boundary = fg & ~interior
    return np.argwhere(boundary).astype(np.float32)


def boundary_jiscore_forward(gt_img, pred_img):
    """Mirrors boundary_jiscore.forward (file IO / cv2 replaced by glue)."""
    point_gt = np.argwhere(gt_img == 255).astype(np.float32)
    point_pred = np.argwhere(pred_img == 255).astype(np.float32)
    contours_gt = _boundary_points(gt_img)
    contours_pred = _boundary_points(pred_img)
    if (len(contours_gt) == 0 or len(point_gt) == 0
            or len(contours_pred) == 0 or len(point_pred) == 0):
        return jnp.float32(0.0)
    tp_gt = get_tp(contours_gt, point_pred)       # device scalar
    tp_pred = get_tp(contours_pred, point_gt)     # device scalar
    fn = len(contours_gt) - tp_gt                 # combined on-device,
    fp = len(contours_pred) - tp_pred             # single host readback at the end
    return (tp_gt + tp_pred) / (tp_gt + tp_pred + fn + fp)


def _get_tp_ref(contours, points):
    # pure-numpy reference of get_TP for verification
    c = np.asarray(contours, np.float64)
    p = np.asarray(points, np.float64)
    d = np.sqrt(((c[:, None, :] - p[None, :, :]) ** 2).sum(-1))
    dmin = np.minimum(d.min(axis=1), THRESHOLD)
    return float((1.0 - (dmin / THRESHOLD) ** 2).sum())


if __name__ == "__main__":
    key = jax.random.PRNGKey(0)
    k_gt, k_pr = jax.random.split(key)
    H = W = 16
    gt_img = np.asarray(
        (jax.random.uniform(k_gt, (H, W)) > 0.5).astype(jnp.uint8) * 255)
    pred_img = np.asarray(
        (jax.random.uniform(k_pr, (H, W)) > 0.5).astype(jnp.uint8) * 255)

    bj = jax.block_until_ready(boundary_jiscore_forward(gt_img, pred_img))

    # correctness check against a pure-numpy reference (single-tile path)
    cg = _boundary_points(gt_img)
    cp = _boundary_points(pred_img)
    pg = np.argwhere(gt_img == 255).astype(np.float32)
    pp = np.argwhere(pred_img == 255).astype(np.float32)
    tp_gt_ref = _get_tp_ref(cg, pp)
    tp_pr_ref = _get_tp_ref(cp, pg)
    fn_ref = len(cg) - tp_gt_ref
    fp_ref = len(cp) - tp_pr_ref
    bj_ref = (tp_gt_ref + tp_pr_ref) / (tp_gt_ref + tp_pr_ref + fn_ref + fp_ref)
    np.testing.assert_allclose(float(bj), bj_ref, rtol=1e-3, atol=1e-3)

    # exercise the multi-tile accumulator path (grid = (4, 2))
    kc, kp2 = jax.random.split(jax.random.PRNGKey(1))
    c_big = np.asarray(
        jax.random.uniform(kc, (600, 2), minval=0.0, maxval=64.0), np.float32)
    p_big = np.asarray(
        jax.random.uniform(kp2, (3000, 2), minval=0.0, maxval=64.0), np.float32)
    tp_big = float(jax.block_until_ready(get_tp(c_big, p_big)))
    np.testing.assert_allclose(tp_big, _get_tp_ref(c_big, p_big),
                               rtol=1e-3, atol=1e-2)

    print("KERNEL_OK")
</pallas_src>

<mosaic_0001>
module attributes {stable_mosaic.version = 11 : i64} {
  func.func @_tp_kernel(%arg0: i32, %arg1: i32, %arg2: memref<1xi32, #tpu.memory_space<smem>>, %arg3: memref<128x2xf32, #tpu.memory_space<vmem>>, %arg4: memref<2x128xf32, #tpu.memory_space<vmem>>, %arg5: memref<1x8x128xf32, #tpu.memory_space<vmem>>, %arg6: memref<128x1xf32, #tpu.memory_space<vmem>>) attributes {dimension_semantics = [#tpu.dimension_semantics<parallel>, #tpu.dimension_semantics<arbitrary>], iteration_bounds = array<i64: 1, 1>, scalar_prefetch = 1 : i64, scratch_operands = 1 : i64, tpu.core_type = #tpu.core_type<tc>, window_params = [{transform_indices = @transform_0, window_bounds = array<i64: 128, 2>}, {transform_indices = @transform_1, window_bounds = array<i64: 2, 128>}, {transform_indices = @transform_2, window_bounds = array<i64: 1, 8, 128>}]} {
    %c128_i32 = arith.constant 128 : i32
    %0 = arith.muli %arg0, %c128_i32 : i32
    %c0_i32 = arith.constant 0 : i32
    %1 = arith.cmpi eq, %arg1, %c0_i32 : i32
    %2 = arith.extui %1 : i1 to i32
    %c0_i32_0 = arith.constant 0 : i32
    %3 = arith.cmpi ne, %2, %c0_i32_0 : i32
    scf.if %3 {
      %cst_14 = arith.constant 1.000000e+30 : f32
      %27 = vector.broadcast %cst_14 : f32 to vector<128x1xf32>
      %c0_15 = arith.constant 0 : index
      %c0_16 = arith.constant 0 : index
      %28 = vector.load %arg6[%c0_15, %c0_16] : memref<128x1xf32, #tpu.memory_space<vmem>>, vector<128x1xf32>
      tpu.vector_store %arg6[%c0_15, %c0_16], %27 {strides = array<i32>} : memref<128x1xf32, #tpu.memory_space<vmem>>, vector<128x1xf32>,
    } else {
    }
    %c0 = arith.constant 0 : index
    %c0_1 = arith.constant 0 : index
    %4 = vector.load %arg3[%c0, %c0_1] : memref<128x2xf32, #tpu.memory_space<vmem>>, vector<128x2xf32>
    %c0_2 = arith.constant 0 : index
    %c0_3 = arith.constant 0 : index
    %5 = vector.load %arg4[%c0_2, %c0_3] : memref<2x128xf32, #tpu.memory_space<vmem>>, vector<2x128xf32>
    %6 = arith.mulf %4, %4 : vector<128x2xf32>
    %cst = arith.constant dense<0.000000e+00> : vector<128xf32>
    %7 = vector.multi_reduction <add>, %6, %cst [1] : vector<128x2xf32> to vector<128xf32>
    %8 = vector.shape_cast %7 : vector<128xf32> to vector<128x1xf32>
    %9 = arith.mulf %5, %5 : vector<2x128xf32>
    %cst_4 = arith.constant dense<0.000000e+00> : vector<128xf32>
    %10 = vector.multi_reduction <add>, %9, %cst_4 [0] : vector<2x128xf32> to vector<128xf32>
    %11 = vector.shape_cast %10 : vector<128xf32> to vector<1x128xf32>
    %cst_5 = arith.constant -2.000000e+00 : f32
    %12 = vector.broadcast %cst_5 : f32 to vector<128x2xf32>
    %13 = arith.mulf %4, %12 : vector<128x2xf32>
    %cst_6 = arith.constant dense<0.000000e+00> : vector<128x128xf32>
    %14 = tpu.matmul %13, %5, %cst_6 {dimension_numbers = #tpu.dot_dimension_numbers<[1], [0], [0], [1], [0, 0, 1, 1], [], []>, precision = #tpu.contract_precision<fp32>} : vector<128x2xf32>, vector<2x128xf32>, vector<128x128xf32> -> vector<128x128xf32>
    %15 = vector.broadcast %8 : vector<128x1xf32> to vector<128x128xf32>
    %16 = vector.broadcast %11 : vector<1x128xf32> to vector<128x128xf32>
    %17 = arith.addf %15, %16 : vector<128x128xf32>
    %18 = arith.addf %17, %14 : vector<128x128xf32>
    %cst_7 = arith.constant dense<0x7F800000> : vector<128xf32>
    %19 = vector.multi_reduction <minimumf>, %18, %cst_7 [1] : vector<128x128xf32> to vector<128xf32>
    %20 = vector.shape_cast %19 : vector<128xf32> to vector<128x1xf32>
    %c0_8 = arith.constant 0 : index
    %c0_9 = arith.constant 0 : index
    %21 = vector.load %arg6[%c0_8, %c0_9] : memref<128x1xf32, #tpu.memory_space<vmem>>, vector<128x1xf32>
    %22 = arith.minimumf %21, %20 : vector<128x1xf32>
    %c0_10 = arith.constant 0 : index
    %c0_11 = arith.constant 0 : index
    %23 = vector.load %arg6[%c0_10, %c0_11] : memref<128x1xf32, #tpu.memory_space<vmem>>, vector<128x1xf32>
    tpu.vector_store %arg6[%c0_10, %c0_11], %22 {strides = array<i32>} : memref<128x1xf32, #tpu.memory_space<vmem>>, vector<128x1xf32>,
    %c0_i32_12 = arith.constant 0 : i32
    %24 = arith.cmpi eq, %arg1, %c0_i32_12 : i32
    %25 = arith.extui %24 : i1 to i32
    %c0_i32_13 = arith.constant 0 : i32
    %26 = arith.cmpi ne, %25, %c0_i32_13 : i32
    scf.if %26 {
      %c0_14 = arith.constant 0 : index
      %c0_15 = arith.constant 0 : index
      %27 = vector.load %arg6[%c0_14, %c0_15] : memref<128x1xf32, #tpu.memory_space<vmem>>, vector<128x1xf32>
      %cst_16 = arith.constant 0.000000e+00 : f32
      %cst_17 = arith.constant 1.600000e+01 : f32
      %28 = vector.broadcast %cst_16 : f32 to vector<128x1xf32>
      %29 = arith.maximumf %28, %27 : vector<128x1xf32>
      %30 = vector.broadcast %cst_17 : f32 to vector<128x1xf32>
      %31 = arith.minimumf %30, %29 : vector<128x1xf32>
      %cst_18 = arith.constant 6.250000e-02 : f32
      %32 = vector.broadcast %cst_18 : f32 to vector<128x1xf32>
      %33 = arith.mulf %31, %32 : vector<128x1xf32>
      %cst_19 = arith.constant 1.000000e+00 : f32
      %34 = vector.broadcast %cst_19 : f32 to vector<128x1xf32>
      %35 = arith.subf %34, %33 : vector<128x1xf32>
      %36 = tpu.iota {dimensions = array<i32: 0>} : vector<128x1xi32>
      %37 = vector.broadcast %0 : i32 to vector<128x1xi32>
      %38 = arith.addi %36, %37 : vector<128x1xi32>
      %c0_20 = arith.constant 0 : index
      %39 = memref.load %arg2[%c0_20] : memref<1xi32, #tpu.memory_space<smem>>
      %40 = vector.broadcast %39 : i32 to vector<128x1xi32>
      %41 = arith.cmpi slt, %38, %40 : vector<128x1xi32>
      %cst_21 = arith.constant 0.000000e+00 : f32
      %42 = vector.broadcast %cst_21 : f32 to vector<128x1xf32>
      %43 = arith.select %41, %35, %42 : vector<128x1xi1>, vector<128x1xf32>
      %44 = vector.shape_cast %43 : vector<128x1xf32> to vector<1x128x1xf32>
      %cst_22 = arith.constant dense<0.000000e+00> : vector<1xf32>
      %45 = vector.multi_reduction <add>, %44, %cst_22 [1, 2] : vector<1x128x1xf32> to vector<1xf32>
      %46 = vector.shape_cast %45 : vector<1xf32> to vector<1x1x1xf32>
      %47 = vector.extract %46[0, 0, 0] : f32 from vector<1x1x1xf32>
      %48 = tpu.iota {dimensions = array<i32: 0>} : vector<8x128xi32>
      %49 = tpu.iota {dimensions = array<i32: 1>} : vector<8x128xi32>
      %c0_i32_23 = arith.constant 0 : i32
      %50 = vector.broadcast %c0_i32_23 : i32 to vector<8x128xi32>
      %51 = arith.cmpi eq, %48, %50 : vector<8x128xi32>
      %c0_i32_24 = arith.constant 0 : i32
      %52 = vector.broadcast %c0_i32_24 : i32 to vector<8x128xi32>
      %53 = arith.cmpi eq, %49, %52 : vector<8x128xi32>
      %54 = arith.andi %51, %53 : vector<8x128xi1>
      %cst_25 = arith.constant 0.000000e+00 : f32
      %55 = vector.broadcast %47 : f32 to vector<8x128xf32>
      %56 = vector.broadcast %cst_25 : f32 to vector<8x128xf32>
      %57 = arith.select %54, %55, %56 : vector<8x128xi1>, vector<8x128xf32>
      %58 = vector.shape_cast %57 : vector<8x128xf32> to vector<1x8x128xf32>
      %c0_26 = arith.constant 0 : index
      %c0_27 = arith.constant 0 : index
      %c0_28 = arith.constant 0 : index
      %59 = vector.load %arg5[%c0_26, %c0_27, %c0_28] : memref<1x8x128xf32, #tpu.memory_space<vmem>>, vector<1x8x128xf32>
      tpu.vector_store %arg5[%c0_26, %c0_27, %c0_28], %58 {strides = array<i32>} : memref<1x8x128xf32, #tpu.memory_space<vmem>>, vector<1x8x128xf32>,
    } else {
    }
    return
  }
  func.func @transform_0(%arg0: i32, %arg1: i32, %arg2: memref<1xi32, #tpu.memory_space<smem>>) -> (i32, i32) {
    %c0_i32 = arith.constant 0 : i32
    %c0_i32_0 = arith.constant 0 : i32
    return %arg0, %c0_i32 : i32, i32
  }
  func.func @transform_1(%arg0: i32, %arg1: i32, %arg2: memref<1xi32, #tpu.memory_space<smem>>) -> (i32, i32) {
    %c0_i32 = arith.constant 0 : i32
    %c0_i32_0 = arith.constant 0 : i32
    return %c0_i32, %arg1 : i32, i32
  }
  func.func @transform_2(%arg0: i32, %arg1: i32, %arg2: memref<1xi32, #tpu.memory_space<smem>>) -> (i32, i32, i32) {
    %c0_i32 = arith.constant 0 : i32
    %c0_i32_0 = arith.constant 0 : i32
    %c0_i32_1 = arith.constant 0 : i32
    return %arg0, %c0_i32, %c0_i32_0 : i32, i32, i32
  }
}

</mosaic_0001>

<llo_original>
// kernel: _lambda_.1
$region0: #{_lambda_.1}
  #allocation0 [shape = 'u32[]', space=smem, size = 0x4, offset = 0x4, fixed_abs, tag = 'smem constant byte address 0x4 - core index']
  #allocation1 [shape = 'u32[72,128]{1,0:T(1,128)}', space=vmem, size = 0x9000, scoped, tag = 'internal scratch']
  #allocation2 [shape = 'f32[128,1]{1,0:T(8,128)}', space=vmem, size = 0x10000, scoped, tag = 'scratch operand']
  #allocation3 [shape = 's32[1]{0}', space=sflag, size = 0x4, scoped, tag = 'scoped memory for _lambda_.1']
  #allocation4 [shape = 's32[1]{0:T(128)S(6)}', space=smem, size = 0x200, scoped, tag = 'prefetched SMEM operand 0']
  %s0 = inlined_call_operand.<no memory space> [shape: s32[1], index: 0, kind: input, shape index: {}]
  %s1 = inlined_call_operand.vmem [shape: f32[128,2], index: 1, kind: input, shape index: {}]
  %s2 = inlined_call_operand.vmem [shape: f32[2,128], index: 2, kind: input, shape index: {}]
  %s3 = inlined_call_operand.vmem [shape: f32[1,8,128], index: 3, kind: output, shape index: {}]
  %s4 = sld [smem:[#allocation0]]
  $region26: #{_lambda_.1} parent=0
    _
  %s6 = ssub.s32 1, %s4
  %s7 = scalar_select 0, %s6, %s4
  %8 = sst [smem:[#allocation4]] %s0
  // Predicated region
  $region2: #{_lambda_.1} parent=0 // pred_check
    _
  $region3: #{_lambda_.1} parent=0 // pred_check_branch
    %10 = sbr.rel (0) target = $region5
  $region4: #{_lambda_.1} parent=0 // pred_region
    _
  $region5: #{_lambda_.1} parent=0 // pred_fallthru
    _
  // Predicated region
  $region6: #{_lambda_.1} parent=0 // pred_check
    _
  $region7: #{_lambda_.1} parent=0 // pred_check_branch
    %12 = sbr.rel (0) target = $region9
  $region8: #{_lambda_.1} parent=0 // pred_region
    _
  $region9: #{_lambda_.1} parent=0 // pred_fallthru
    _
  %s13 = smul.u32 0, 128
  %p14 = scmp.eq.s32.totalorder 0, 0
  // Predicated region
  $region10: #{_lambda_.1} parent=0 // pred_check
    %p15 = pneg %p14
  $region11: #{_lambda_.1} parent=0 // pred_check_branch
    %17 = sbr.rel (%p15) target = $region13
  $region12: #{_lambda_.1} parent=0 // pred_region
    %vm18 = vcmask 7168
    %19 = vst.msk [vmem:[#allocation2] sm:$0xff] %vm18, 1e+30
    %20 = vst.msk [vmem:[#allocation2 + $0x8] sm:$0xff] %vm18, 1e+30
    %21 = vst.msk [vmem:[#allocation2 + $0x10] sm:$0xff] %vm18, 1e+30
    %22 = vst.msk [vmem:[#allocation2 + $0x18] sm:$0xff] %vm18, 1e+30
    %23 = vst.msk [vmem:[#allocation2 + $0x20] sm:$0xff] %vm18, 1e+30
    %24 = vst.msk [vmem:[#allocation2 + $0x28] sm:$0xff] %vm18, 1e+30
    %25 = vst.msk [vmem:[#allocation2 + $0x30] sm:$0xff] %vm18, 1e+30
    %26 = vst.msk [vmem:[#allocation2 + $0x38] sm:$0xff] %vm18, 1e+30
    %27 = vst.msk [vmem:[#allocation2 + $0x40] sm:$0xff] %vm18, 1e+30
    %28 = vst.msk [vmem:[#allocation2 + $0x48] sm:$0xff] %vm18, 1e+30
    %29 = vst.msk [vmem:[#allocation2 + $0x50] sm:$0xff] %vm18, 1e+30
    %30 = vst.msk [vmem:[#allocation2 + $0x58] sm:$0xff] %vm18, 1e+30
    %31 = vst.msk [vmem:[#allocation2 + $0x60] sm:$0xff] %vm18, 1e+30
    %32 = vst.msk [vmem:[#allocation2 + $0x68] sm:$0xff] %vm18, 1e+30
    %33 = vst.msk [vmem:[#allocation2 + $0x70] sm:$0xff] %vm18, 1e+30
    %34 = vst.msk [vmem:[#allocation2 + $0x78] sm:$0xff] %vm18, 1e+30
  $region13: #{_lambda_.1} parent=0 // pred_fallthru
    _
  %v35 = vld [vmem:[%s1] sm:$0xff]
  %v36 = vld [vmem:[%s1 + $0x8] sm:$0xff]
  %v37 = vld [vmem:[%s1 + $0x10] sm:$0xff]
  %v38 = vld [vmem:[%s1 + $0x18] sm:$0xff]
  %v39 = vld [vmem:[%s1 + $0x20] sm:$0xff]
  %v40 = vld [vmem:[%s1 + $0x28] sm:$0xff]
  %v41 = vld [vmem:[%s1 + $0x30] sm:$0xff]
  %v42 = vld [vmem:[%s1 + $0x38] sm:$0xff]
  %v43 = vld [vmem:[%s1 + $0x40] sm:$0xff]
  %v44 = vld [vmem:[%s1 + $0x48] sm:$0xff]
  %v45 = vld [vmem:[%s1 + $0x50] sm:$0xff]
  %v46 = vld [vmem:[%s1 + $0x58] sm:$0xff]
  %v47 = vld [vmem:[%s1 + $0x60] sm:$0xff]
  %v48 = vld [vmem:[%s1 + $0x68] sm:$0xff]
  %v49 = vld [vmem:[%s1 + $0x70] sm:$0xff]
  %v50 = vld [vmem:[%s1 + $0x78] sm:$0xff]
  %v51 = vld [vmem:[%s2] sm:$0x3]
  %v52 = vmul.f32 %v35, %v35
  %v53 = vmul.f32 %v36, %v36
  %v54 = vmul.f32 %v37, %v37
  %v55 = vmul.f32 %v38, %v38
  %v56 = vmul.f32 %v39, %v39
  %v57 = vmul.f32 %v40, %v40
  %v58 = vmul.f32 %v41, %v41
  %v59 = vmul.f32 %v42, %v42
  %v60 = vmul.f32 %v43, %v43
  %v61 = vmul.f32 %v44, %v44
  %v62 = vmul.f32 %v45, %v45
  %v63 = vmul.f32 %v46, %v46
  %v64 = vmul.f32 %v47, %v47
  %v65 = vmul.f32 %v48, %v48
  %v66 = vmul.f32 %v49, %v49
  %v67 = vmul.f32 %v50, %v50
  %vm68 = vcmask 15360
  %v69 = vsel %vm68, %v52, 0.0
  %70 = vadd.xlane.f32.xlu0 %v69
  %v71 = vpop.xlane.xlu0 %70
  %v72 = vsel %vm68, %v53, 0.0
  %73 = vadd.xlane.f32.xlu0 %v72
  %v74 = vpop.xlane.xlu0 %73
  %v75 = vsel %vm68, %v54, 0.0
  %76 = vadd.xlane.f32.xlu0 %v75
  %v77 = vpop.xlane.xlu0 %76
  %v78 = vsel %vm68, %v55, 0.0
  %79 = vadd.xlane.f32.xlu0 %v78
  %v80 = vpop.xlane.xlu0 %79
  %v81 = vsel %vm68, %v56, 0.0
  %82 = vadd.xlane.f32.xlu0 %v81
  %v83 = vpop.xlane.xlu0 %82
  %v84 = vsel %vm68, %v57, 0.0
  %85 = vadd.xlane.f32.xlu0 %v84
  %v86 = vpop.xlane.xlu0 %85
  %v87 = vsel %vm68, %v58, 0.0
  %88 = vadd.xlane.f32.xlu0 %v87
  %v89 = vpop.xlane.xlu0 %88
  %v90 = vsel %vm68, %v59, 0.0
  %91 = vadd.xlane.f32.xlu0 %v90
  %v92 = vpop.xlane.xlu0 %91
  %v93 = vsel %vm68, %v60, 0.0
  %94 = vadd.xlane.f32.xlu0 %v93
  %v95 = vpop.xlane.xlu0 %94
  %v96 = vsel %vm68, %v61, 0.0
  %97 = vadd.xlane.f32.xlu0 %v96
  %v98 = vpop.xlane.xlu0 %97
  %v99 = vsel %vm68, %v62, 0.0
  %100 = vadd.xlane.f32.xlu0 %v99
  %v101 = vpop.xlane.xlu0 %100
  %v102 = vsel %vm68, %v63, 0.0
  %103 = vadd.xlane.f32.xlu0 %v102
  %v104 = vpop.xlane.xlu0 %103
  %v105 = vsel %vm68, %v64, 0.0
  %106 = vadd.xlane.f32.xlu0 %v105
  %v107 = vpop.xlane.xlu0 %106
  %v108 = vsel %vm68, %v65, 0.0
  %109 = vadd.xlane.f32.xlu0 %v108
  %v110 = vpop.xlane.xlu0 %109
  %v111 = vsel %vm68, %v66, 0.0
  %112 = vadd.xlane.f32.xlu0 %v111
  %v113 = vpop.xlane.xlu0 %112
  %v114 = vsel %vm68, %v67, 0.0
  %115 = vadd.xlane.f32.xlu0 %v114
  %v116 = vpop.xlane.xlu0 %115
  %v117 = vmul.f32 %v51, %v51
  %vm118 = vcmask 1041408
  %v119 = vsel %vm118, %v117, 0.0
  %v120 = vrot.slane %v119, 4
  %v121 = vadd.f32 %v119, %v120
  %v122 = vrot.slane %v121, 2
  %v123 = vadd.f32 %v121, %v122
  %v124 = vrot.slane %v123, 1
  %v125 = vadd.f32 %v123, %v124
  %v126 = vmul.f32 %v35, -2.0
  %v127 = vmul.f32 %v36, -2.0
  %v128 = vmul.f32 %v37, -2.0
  %v129 = vmul.f32 %v38, -2.0
  %v130 = vmul.f32 %v39, -2.0
  %v131 = vmul.f32 %v40, -2.0
  %v132 = vmul.f32 %v41, -2.0
  %v133 = vmul.f32 %v42, -2.0
  %v134 = vmul.f32 %v43, -2.0
  %v135 = vmul.f32 %v44, -2.0
  %v136 = vmul.f32 %v45, -2.0
  %v137 = vmul.f32 %v46, -2.0
  %v138 = vmul.f32 %v47, -2.0
  %v139 = vmul.f32 %v48, -2.0
  %v140 = vmul.f32 %v49, -2.0
  %v141 = vmul.f32 %v50, -2.0
  %v143 = vsel %vm68, %v126, 0
  %v146 = vsel %vm68, %v127, 0
  %v149 = vsel %vm68, %v128, 0
  %v152 = vsel %vm68, %v129, 0
  %v155 = vsel %vm68, %v130, 0
  %v158 = vsel %vm68, %v131, 0
  %v161 = vsel %vm68, %v132, 0
  %v164 = vsel %vm68, %v133, 0
  %v167 = vsel %vm68, %v134, 0
  %v170 = vsel %vm68, %v135, 0
  %v173 = vsel %vm68, %v136, 0
  %v176 = vsel %vm68, %v137, 0
  %v179 = vsel %vm68, %v138, 0
  %v182 = vsel %vm68, %v139, 0
  %v185 = vsel %vm68, %v140, 0
  %v188 = vsel %vm68, %v141, 0
  %v191 = vsel %vm118, %v51, 0
  %193 = vmatpush.msra.mxu0 0.0
  %194 = vmatpush.msra.mxu0 0.0
  %195 = vmatpush.msra.mxu0 0.0
  %196 = vmatpush.msra.mxu0 0.0
  %197 = vmatpush.msra.mxu0 0.0
  %198 = vmatpush.msra.mxu0 0.0
  %199 = vmatpush.msra.mxu0 0.0
  %200 = vmatpush.msra.mxu0 0.0
  %201 = vmatpush.msra.mxu0 0.0
  %202 = vmatpush.msra.mxu0 0.0
  %203 = vmatpush.msra.mxu0 0.0
  %204 = vmatpush.msra.mxu0 0.0
  %205 = vmatpush.msra.mxu0 0.0
  %206 = vmatpush.msra.mxu0 0.0
  %207 = vmatpush.msra.mxu0 0.0
  %v208 = vand.u32 %v191, 4294901760
  %209 = vmatpush.msra.mxu0 %v208
  %v210 = vand.u32 %v143, 4294901760
  %v211 = vsub.f32 %v143, %v210
  %v212 = vand.u32 %v211, 4294901760
  %v213 = vsub.f32 %v211, %v212
  %v214 = vand.u32 %v213, 4294901760
  %215 = vmatmul.f32.gmra.mxu0 %v214
  %v216 = vpop.f32.mrf.mxu0
  %v217 = vadd.f32 0.0, %v216
  %v218 = vand.u32 %v146, 4294901760
  %v219 = vsub.f32 %v146, %v218
  %v220 = vand.u32 %v219, 4294901760
  %v221 = vsub.f32 %v219, %v220
  %v222 = vand.u32 %v221, 4294901760
  %223 = vmatmul.f32.gmra.mxu0 %v222
  %v224 = vpop.f32.mrf.mxu0
  %v225 = vadd.f32 0.0, %v224
  %v226 = vand.u32 %v149, 4294901760
  %v227 = vsub.f32 %v149, %v226
  %v228 = vand.u32 %v227, 4294901760
  %v229 = vsub.f32 %v227, %v228
  %v230 = vand.u32 %v229, 4294901760
  %231 = vmatmul.f32.gmra.mxu0 %v230
  %v232 = vpop.f32.mrf.mxu0
  %v233 = vadd.f32 0.0, %v232
  %v234 = vand.u32 %v152, 4294901760
  %v235 = vsub.f32 %v152, %v234
  %v236 = vand.u32 %v235, 4294901760
  %v237 = vsub.f32 %v235, %v236
  %v238 = vand.u32 %v237, 4294901760
  %239 = vmatmul.f32.gmra.mxu0 %v238
  %v240 = vpop.f32.mrf.mxu0
  %v241 = vadd.f32 0.0, %v240
  %v242 = vand.u32 %v155, 4294901760
  %v243 = vsub.f32 %v155, %v242
  %v244 = vand.u32 %v243, 4294901760
  %v245 = vsub.f32 %v243, %v244
  %v246 = vand.u32 %v245, 4294901760
  %247 = vmatmul.f32.gmra.mxu0 %v246
  %v248 = vpop.f32.mrf.mxu0
  %v249 = vadd.f32 0.0, %v248
  %v250 = vand.u32 %v158, 4294901760
  %v251 = vsub.f32 %v158, %v250
  %v252 = vand.u32 %v251, 4294901760
  %v253 = vsub.f32 %v251, %v252
  %v254 = vand.u32 %v253, 4294901760
  %255 = vmatmul.f32.gmra.mxu0 %v254
  %v256 = vpop.f32.mrf.mxu0
  %v257 = vadd.f32 0.0, %v256
  %v258 = vand.u32 %v161, 4294901760
  %v259 = vsub.f32 %v161, %v258
  %v260 = vand.u32 %v259, 4294901760
  %v261 = vsub.f32 %v259, %v260
  %v262 = vand.u32 %v261, 4294901760
  %263 = vmatmul.f32.gmra.mxu0 %v262
  %v264 = vpop.f32.mrf.mxu0
  %v265 = vadd.f32 0.0, %v264
  %v266 = vand.u32 %v164, 4294901760
  %v267 = vsub.f32 %v164, %v266
  %v268 = vand.u32 %v267, 4294901760
  %v269 = vsub.f32 %v267, %v268
  %v270 = vand.u32 %v269, 4294901760
  %271 = vmatmul.f32.gmra.mxu0 %v270
  %v272 = vpop.f32.mrf.mxu0
  %v273 = vadd.f32 0.0, %v272
  %v274 = vand.u32 %v167, 4294901760
  %v275 = vsub.f32 %v167, %v274
  %v276 = vand.u32 %v275, 4294901760
  %v277 = vsub.f32 %v275, %v276
  %v278 = vand.u32 %v277, 4294901760
  %279 = vmatmul.f32.gmra.mxu0 %v278
  %v280 = vpop.f32.mrf.mxu0
  %v281 = vadd.f32 0.0, %v280
  %v282 = vand.u32 %v170, 4294901760
  %v283 = vsub.f32 %v170, %v282
  %v284 = vand.u32 %v283, 4294901760
  %v285 = vsub.f32 %v283, %v284
  %v286 = vand.u32 %v285, 4294901760
  %287 = vmatmul.f32.gmra.mxu0 %v286
  %v288 = vpop.f32.mrf.mxu0
  %v289 = vadd.f32 0.0, %v288
  %v290 = vand.u32 %v173, 4294901760
  %v291 = vsub.f32 %v173, %v290
  %v292 = vand.u32 %v291, 4294901760
  %v293 = vsub.f32 %v291, %v292
  %v294 = vand.u32 %v293, 4294901760
  %295 = vmatmul.f32.gmra.mxu0 %v294
  %v296 = vpop.f32.mrf.mxu0
  %v297 = vadd.f32 0.0, %v296
  %v298 = vand.u32 %v176, 4294901760
  %v299 = vsub.f32 %v176, %v298
  %v300 = vand.u32 %v299, 4294901760
  %v301 = vsub.f32 %v299, %v300
  %v302 = vand.u32 %v301, 4294901760
  %303 = vmatmul.f32.gmra.mxu0 %v302
  %v304 = vpop.f32.mrf.mxu0
  %v305 = vadd.f32 0.0, %v304
  %v306 = vand.u32 %v179, 4294901760
  %v307 = vsub.f32 %v179, %v306
  %v308 = vand.u32 %v307, 4294901760
  %v309 = vsub.f32 %v307, %v308
  %v310 = vand.u32 %v309, 4294901760
  %311 = vmatmul.f32.gmra.mxu0 %v310
  %v312 = vpop.f32.mrf.mxu0
  %v313 = vadd.f32 0.0, %v312
  %v314 = vand.u32 %v182, 4294901760
  %v315 = vsub.f32 %v182, %v314
  %v316 = vand.u32 %v315, 4294901760
  %v317 = vsub.f32 %v315, %v316
  %v318 = vand.u32 %v317, 4294901760
  %319 = vmatmul.f32.gmra.mxu0 %v318
  %v320 = vpop.f32.mrf.mxu0
  %v321 = vadd.f32 0.0, %v320
  %v322 = vand.u32 %v185, 4294901760
  %v323 = vsub.f32 %v185, %v322
  %v324 = vand.u32 %v323, 4294901760
  %v325 = vsub.f32 %v323, %v324
  %v326 = vand.u32 %v325, 4294901760
  %327 = vmatmul.f32.gmra.mxu0 %v326
  %v328 = vpop.f32.mrf.mxu0
  %v329 = vadd.f32 0.0, %v328
  %v330 = vand.u32 %v188, 4294901760
  %v331 = vsub.f32 %v188, %v330
  %v332 = vand.u32 %v331, 4294901760
  %v333 = vsub.f32 %v331, %v332
  %v334 = vand.u32 %v333, 4294901760
  %335 = vmatmul.f32.gmra.mxu0 %v334
  %v336 = vpop.f32.mrf.mxu0
  %v337 = vadd.f32 0.0, %v336
  %338 = vdwg.mxu0
  %339 = vmatpush.msra.mxu0 0.0
  %340 = vmatpush.msra.mxu0 0.0
  %341 = vmatpush.msra.mxu0 0.0
  %342 = vmatpush.msra.mxu0 0.0
  %343 = vmatpush.msra.mxu0 0.0
  %344 = vmatpush.msra.mxu0 0.0
  %345 = vmatpush.msra.mxu0 0.0
  %346 = vmatpush.msra.mxu0 0.0
  %347 = vmatpush.msra.mxu0 0.0
  %348 = vmatpush.msra.mxu0 0.0
  %349 = vmatpush.msra.mxu0 0.0
  %350 = vmatpush.msra.mxu0 0.0
  %351 = vmatpush.msra.mxu0 0.0
  %352 = vmatpush.msra.mxu0 0.0
  %353 = vmatpush.msra.mxu0 0.0
  %v354 = vand.u32 %v191, 4294901760
  %v355 = vsub.f32 %v191, %v354
  %v356 = vand.u32 %v355, 4294901760
  %v357 = vsub.f32 %v355, %v356
  %v358 = vand.u32 %v357, 4294901760
  %359 = vmatpush.msra.mxu0 %v358
  %v360 = vand.u32 %v143, 4294901760
  %361 = vmatmul.f32.gmra.mxu0 %v360
  %v362 = vpop.f32.mrf.mxu0
  %v363 = vadd.f32 %v217, %v362
  %v364 = vand.u32 %v146, 4294901760
  %365 = vmatmul.f32.gmra.mxu0 %v364
  %v366 = vpop.f32.mrf.mxu0
  %v367 = vadd.f32 %v225, %v366
  %v368 = vand.u32 %v149, 4294901760
  %369 = vmatmul.f32.gmra.mxu0 %v368
  %v370 = vpop.f32.mrf.mxu0
  %v371 = vadd.f32 %v233, %v370
  %v372 = vand.u32 %v152, 4294901760
  %373 = vmatmul.f32.gmra.mxu0 %v372
  %v374 = vpop.f32.mrf.mxu0
  %v375 = vadd.f32 %v241, %v374
  %v376 = vand.u32 %v155, 4294901760
  %377 = vmatmul.f32.gmra.mxu0 %v376
  %v378 = vpop.f32.mrf.mxu0
  %v379 = vadd.f32 %v249, %v378
  %v380 = vand.u32 %v158, 4294901760
  %381 = vmatmul.f32.gmra.mxu0 %v380
  %v382 = vpop.f32.mrf.mxu0
  %v383 = vadd.f32 %v257, %v382
  %v384 = vand.u32 %v161, 4294901760
  %385 = vmatmul.f32.gmra.mxu0 %v384
  %v386 = vpop.f32.mrf.mxu0
  %v387 = vadd.f32 %v265, %v386
  %v388 = vand.u32 %v164, 4294901760
  %389 = vmatmul.f32.gmra.mxu0 %v388
  %v390 = vpop.f32.mrf.mxu0
  %v391 = vadd.f32 %v273, %v390
  %v392 = vand.u32 %v167, 4294901760
  %393 = vmatmul.f32.gmra.mxu0 %v392
  %v394 = vpop.f32.mrf.mxu0
  %v395 = vadd.f32 %v281, %v394
  %v396 = vand.u32 %v170, 4294901760
  %397 = vmatmul.f32.gmra.mxu0 %v396
  %v398 = vpop.f32.mrf.mxu0
  %v399 = vadd.f32 %v289, %v398
  %v400 = vand.u32 %v173, 4294901760
  %401 = vmatmul.f32.gmra.mxu0 %v400
  %v402 = vpop.f32.mrf.mxu0
  %v403 = vadd.f32 %v297, %v402
  %v404 = vand.u32 %v176, 4294901760
  %405 = vmatmul.f32.gmra.mxu0 %v404
  %v406 = vpop.f32.mrf.mxu0
  %v407 = vadd.f32 %v305, %v406
  %v408 = vand.u32 %v179, 4294901760
  %409 = vmatmul.f32.gmra.mxu0 %v408
  %v410 = vpop.f32.mrf.mxu0
  %v411 = vadd.f32 %v313, %v410
  %v412 = vand.u32 %v182, 4294901760
  %413 = vmatmul.f32.gmra.mxu0 %v412
  %v414 = vpop.f32.mrf.mxu0
  %v415 = vadd.f32 %v321, %v414
  %v416 = vand.u32 %v185, 4294901760
  %417 = vmatmul.f32.gmra.mxu0 %v416
  %v418 = vpop.f32.mrf.mxu0
  %v419 = vadd.f32 %v329, %v418
  %v420 = vand.u32 %v188, 4294901760
  %421 = vmatmul.f32.gmra.mxu0 %v420
  %v422 = vpop.f32.mrf.mxu0
  %v423 = vadd.f32 %v337, %v422
  %424 = vdwg.mxu0
  %425 = vmatpush.msra.mxu0 0.0
  %426 = vmatpush.msra.mxu0 0.0
  %427 = vmatpush.msra.mxu0 0.0
  %428 = vmatpush.msra.mxu0 0.0
  %429 = vmatpush.msra.mxu0 0.0
  %430 = vmatpush.msra.mxu0 0.0
  %431 = vmatpush.msra.mxu0 0.0
  %432 = vmatpush.msra.mxu0 0.0
  %433 = vmatpush.msra.mxu0 0.0
  %434 = vmatpush.msra.mxu0 0.0
  %435 = vmatpush.msra.mxu0 0.0
  %436 = vmatpush.msra.mxu0 0.0
  %437 = vmatpush.msra.mxu0 0.0
  %438 = vmatpush.msra.mxu0 0.0
  %439 = vmatpush.msra.mxu0 0.0
  %v440 = vand.u32 %v191, 4294901760
  %v441 = vsub.f32 %v191, %v440
  %442 = vmatpush.msra.mxu0 %v441
  %v443 = vand.u32 %v143, 4294901760
  %v444 = vsub.f32 %v143, %v443
  %445 = vmatmul.f32.gmra.mxu0 %v444
  %v446 = vpop.f32.mrf.mxu0
  %v447 = vadd.f32 %v363, %v446
  %v448 = vand.u32 %v146, 4294901760
  %v449 = vsub.f32 %v146, %v448
  %450 = vmatmul.f32.gmra.mxu0 %v449
  %v451 = vpop.f32.mrf.mxu0
  %v452 = vadd.f32 %v367, %v451
  %v453 = vand.u32 %v149, 4294901760
  %v454 = vsub.f32 %v149, %v453
  %455 = vmatmul.f32.gmra.mxu0 %v454
  %v456 = vpop.f32.mrf.mxu0
  %v457 = vadd.f32 %v371, %v456
  %v458 = vand.u32 %v152, 4294901760
  %v459 = vsub.f32 %v152, %v458
  %460 = vmatmul.f32.gmra.mxu0 %v459
  %v461 = vpop.f32.mrf.mxu0
  %v462 = vadd.f32 %v375, %v461
  %v463 = vand.u32 %v155, 4294901760
  %v464 = vsub.f32 %v155, %v463
  %465 = vmatmul.f32.gmra.mxu0 %v464
  %v466 = vpop.f32.mrf.mxu0
  %v467 = vadd.f32 %v379, %v466
  %v468 = vand.u32 %v158, 4294901760
  %v469 = vsub.f32 %v158, %v468
  %470 = vmatmul.f32.gmra.mxu0 %v469
  %v471 = vpop.f32.mrf.mxu0
  %v472 = vadd.f32 %v383, %v471
  %v473 = vand.u32 %v161, 4294901760
  %v474 = vsub.f32 %v161, %v473
  %475 = vmatmul.f32.gmra.mxu0 %v474
  %v476 = vpop.f32.mrf.mxu0
  %v477 = vadd.f32 %v387, %v476
  %v478 = vand.u32 %v164, 4294901760
  %v479 = vsub.f32 %v164, %v478
  %480 = vmatmul.f32.gmra.mxu0 %v479
  %v481 = vpop.f32.mrf.mxu0
  %v482 = vadd.f32 %v391, %v481
  %v483 = vand.u32 %v167, 4294901760
  %v484 = vsub.f32 %v167, %v483
  %485 = vmatmul.f32.gmra.mxu0 %v484
  %v486 = vpop.f32.mrf.mxu0
  %v487 = vadd.f32 %v395, %v486
  %v488 = vand.u32 %v170, 4294901760
  %v489 = vsub.f32 %v170, %v488
  %490 = vmatmul.f32.gmra.mxu0 %v489
  %v491 = vpop.f32.mrf.mxu0
  %v492 = vadd.f32 %v399, %v491
  %v493 = vand.u32 %v173, 4294901760
  %v494 = vsub.f32 %v173, %v493
  %495 = vmatmul.f32.gmra.mxu0 %v494
  %v496 = vpop.f32.mrf.mxu0
  %v497 = vadd.f32 %v403, %v496
  %v498 = vand.u32 %v176, 4294901760
  %v499 = vsub.f32 %v176, %v498
  %500 = vmatmul.f32.gmra.mxu0 %v499
  %v501 = vpop.f32.mrf.mxu0
  %v502 = vadd.f32 %v407, %v501
  %v503 = vand.u32 %v179, 4294901760
  %v504 = vsub.f32 %v179, %v503
  %505 = vmatmul.f32.gmra.mxu0 %v504
  %v506 = vpop.f32.mrf.mxu0
  %v507 = vadd.f32 %v411, %v506
  %v508 = vand.u32 %v182, 4294901760
  %v509 = vsub.f32 %v182, %v508
  %510 = vmatmul.f32.gmra.mxu0 %v509
  %v511 = vpop.f32.mrf.mxu0
  %v512 = vadd.f32 %v415, %v511
  %v513 = vand.u32 %v185, 4294901760
  %v514 = vsub.f32 %v185, %v513
  %515 = vmatmul.f32.gmra.mxu0 %v514
  %v516 = vpop.f32.mrf.mxu0
  %v517 = vadd.f32 %v419, %v516
  %v518 = vand.u32 %v188, 4294901760
  %v519 = vsub.f32 %v188, %v518
  %520 = vmatmul.f32.gmra.mxu0 %v519
  %v521 = vpop.f32.mrf.mxu0
  %v522 = vadd.f32 %v423, %v521
  %523 = vdwg.mxu0
  %524 = vmatpush.msra.mxu0 0.0
  %525 = vmatpush.msra.mxu0 0.0
  %526 = vmatpush.msra.mxu0 0.0
  %527 = vmatpush.msra.mxu0 0.0
  %528 = vmatpush.msra.mxu0 0.0
  %529 = vmatpush.msra.mxu0 0.0
  %530 = vmatpush.msra.mxu0 0.0
  %531 = vmatpush.msra.mxu0 0.0
  %532 = vmatpush.msra.mxu0 0.0
  %533 = vmatpush.msra.mxu0 0.0
  %534 = vmatpush.msra.mxu0 0.0
  %535 = vmatpush.msra.mxu0 0.0
  %536 = vmatpush.msra.mxu0 0.0
  %537 = vmatpush.msra.mxu0 0.0
  %538 = vmatpush.msra.mxu0 0.0
  %v539 = vand.u32 %v191, 4294901760
  %540 = vmatpush.msra.mxu0 %v539
  %v541 = vand.u32 %v143, 4294901760
  %v542 = vsub.f32 %v143, %v541
  %v543 = vand.u32 %v542, 4294901760
  %544 = vmatmul.f32.gmra.mxu0 %v543
  %v545 = vpop.f32.mrf.mxu0
  %v546 = vadd.f32 %v447, %v545
  %v547 = vand.u32 %v146, 4294901760
  %v548 = vsub.f32 %v146, %v547
  %v549 = vand.u32 %v548, 4294901760
  %550 = vmatmul.f32.gmra.mxu0 %v549
  %v551 = vpop.f32.mrf.mxu0
  %v552 = vadd.f32 %v452, %v551
  %v553 = vand.u32 %v149, 4294901760
  %v554 = vsub.f32 %v149, %v553
  %v555 = vand.u32 %v554, 4294901760
  %556 = vmatmul.f32.gmra.mxu0 %v555
  %v557 = vpop.f32.mrf.mxu0
  %v558 = vadd.f32 %v457, %v557
  %v559 = vand.u32 %v152, 4294901760
  %v560 = vsub.f32 %v152, %v559
  %v561 = vand.u32 %v560, 4294901760
  %562 = vmatmul.f32.gmra.mxu0 %v561
  %v563 = vpop.f32.mrf.mxu0
  %v564 = vadd.f32 %v462, %v563
  %v565 = vand.u32 %v155, 4294901760
  %v566 = vsub.f32 %v155, %v565
  %v567 = vand.u32 %v566, 4294901760
  %568 = vmatmul.f32.gmra.mxu0 %v567
  %v569 = vpop.f32.mrf.mxu0
  %v570 = vadd.f32 %v467, %v569
  %v571 = vand.u32 %v158, 4294901760
  %v572 = vsub.f32 %v158, %v571
  %v573 = vand.u32 %v572, 4294901760
  %574 = vmatmul.f32.gmra.mxu0 %v573
  %v575 = vpop.f32.mrf.mxu0
  %v576 = vadd.f32 %v472, %v575
  %v577 = vand.u32 %v161, 4294901760
  %v578 = vsub.f32 %v161, %v577
  %v579 = vand.u32 %v578, 4294901760
  %580 = vmatmul.f32.gmra.mxu0 %v579
  %v581 = vpop.f32.mrf.mxu0
  %v582 = vadd.f32 %v477, %v581
  %v583 = vand.u32 %v164, 4294901760
  %v584 = vsub.f32 %v164, %v583
  %v585 = vand.u32 %v584, 4294901760
  %586 = vmatmul.f32.gmra.mxu0 %v585
  %v587 = vpop.f32.mrf.mxu0
  %v588 = vadd.f32 %v482, %v587
  %v589 = vand.u32 %v167, 4294901760
  %v590 = vsub.f32 %v167, %v589
  %v591 = vand.u32 %v590, 4294901760
  %592 = vmatmul.f32.gmra.mxu0 %v591
  %v593 = vpop.f32.mrf.mxu0
  %v594 = vadd.f32 %v487, %v593
  %v595 = vand.u32 %v170, 4294901760
  %v596 = vsub.f32 %v170, %v595
  %v597 = vand.u32 %v596, 4294901760
  %598 = vmatmul.f32.gmra.mxu0 %v597
  %v599 = vpop.f32.mrf.mxu0
  %v600 = vadd.f32 %v492, %v599
  %v601 = vand.u32 %v173, 4294901760
  %v602 = vsub.f32 %v173, %v601
  %v603 = vand.u32 %v602, 4294901760
  %604 = vmatmul.f32.gmra.mxu0 %v603
  %v605 = vpop.f32.mrf.mxu0
  %v606 = vadd.f32 %v497, %v605
  %v607 = vand.u32 %v176, 4294901760
  %v608 = vsub.f32 %v176, %v607
  %v609 = vand.u32 %v608, 4294901760
  %610 = vmatmul.f32.gmra.mxu0 %v609
  %v611 = vpop.f32.mrf.mxu0
  %v612 = vadd.f32 %v502, %v611
  %v613 = vand.u32 %v179, 4294901760
  %v614 = vsub.f32 %v179, %v613
  %v615 = vand.u32 %v614, 4294901760
  %616 = vmatmul.f32.gmra.mxu0 %v615
  %v617 = vpop.f32.mrf.mxu0
  %v618 = vadd.f32 %v507, %v617
  %v619 = vand.u32 %v182, 4294901760
  %v620 = vsub.f32 %v182, %v619
  %v621 = vand.u32 %v620, 4294901760
  %622 = vmatmul.f32.gmra.mxu0 %v621
  %v623 = vpop.f32.mrf.mxu0
  %v624 = vadd.f32 %v512, %v623
  %v625 = vand.u32 %v185, 4294901760
  %v626 = vsub.f32 %v185, %v625
  %v627 = vand.u32 %v626, 4294901760
  %628 = vmatmul.f32.gmra.mxu0 %v627
  %v629 = vpop.f32.mrf.mxu0
  %v630 = vadd.f32 %v517, %v629
  %v631 = vand.u32 %v188, 4294901760
  %v632 = vsub.f32 %v188, %v631
  %v633 = vand.u32 %v632, 4294901760
  %634 = vmatmul.f32.gmra.mxu0 %v633
  %v635 = vpop.f32.mrf.mxu0
  %v636 = vadd.f32 %v522, %v635
  %637 = vdwg.mxu0
  %638 = vmatpush.msra.mxu0 0.0
  %639 = vmatpush.msra.mxu0 0.0
  %640 = vmatpush.msra.mxu0 0.0
  %641 = vmatpush.msra.mxu0 0.0
  %642 = vmatpush.msra.mxu0 0.0
  %643 = vmatpush.msra.mxu0 0.0
  %644 = vmatpush.msra.mxu0 0.0
  %645 = vmatpush.msra.mxu0 0.0
  %646 = vmatpush.msra.mxu0 0.0
  %647 = vmatpush.msra.mxu0 0.0
  %648 = vmatpush.msra.mxu0 0.0
  %649 = vmatpush.msra.mxu0 0.0
  %650 = vmatpush.msra.mxu0 0.0
  %651 = vmatpush.msra.mxu0 0.0
  %652 = vmatpush.msra.mxu0 0.0
  %v653 = vand.u32 %v191, 4294901760
  %v654 = vsub.f32 %v191, %v653
  %v655 = vand.u32 %v654, 4294901760
  %656 = vmatpush.msra.mxu0 %v655
  %v657 = vand.u32 %v143, 4294901760
  %658 = vmatmul.f32.gmra.mxu0 %v657
  %v659 = vpop.f32.mrf.mxu0
  %v660 = vadd.f32 %v546, %v659
  %v661 = vand.u32 %v146, 4294901760
  %662 = vmatmul.f32.gmra.mxu0 %v661
  %v663 = vpop.f32.mrf.mxu0
  %v664 = vadd.f32 %v552, %v663
  %v665 = vand.u32 %v149, 4294901760
  %666 = vmatmul.f32.gmra.mxu0 %v665
  %v667 = vpop.f32.mrf.mxu0
  %v668 = vadd.f32 %v558, %v667
  %v669 = vand.u32 %v152, 4294901760
  %670 = vmatmul.f32.gmra.mxu0 %v669
  %v671 = vpop.f32.mrf.mxu0
  %v672 = vadd.f32 %v564, %v671
  %v673 = vand.u32 %v155, 4294901760
  %674 = vmatmul.f32.gmra.mxu0 %v673
  %v675 = vpop.f32.mrf.mxu0
  %v676 = vadd.f32 %v570, %v675
  %v677 = vand.u32 %v158, 4294901760
  %678 = vmatmul.f32.gmra.mxu0 %v677
  %v679 = vpop.f32.mrf.mxu0
  %v680 = vadd.f32 %v576, %v679
  %v681 = vand.u32 %v161, 4294901760
  %682 = vmatmul.f32.gmra.mxu0 %v681
  %v683 = vpop.f32.mrf.mxu0
  %v684 = vadd.f32 %v582, %v683
  %v685 = vand.u32 %v164, 4294901760
  %686 = vmatmul.f32.gmra.mxu0 %v685
  %v687 = vpop.f32.mrf.mxu0
  %v688 = vadd.f32 %v588, %v687
  %v689 = vand.u32 %v167, 4294901760
  %690 = vmatmul.f32.gmra.mxu0 %v689
  %v691 = vpop.f32.mrf.mxu0
  %v692 = vadd.f32 %v594, %v691
  %v693 = vand.u32 %v170, 4294901760
  %694 = vmatmul.f32.gmra.mxu0 %v693
  %v695 = vpop.f32.mrf.mxu0
  %v696 = vadd.f32 %v600, %v695
  %v697 = vand.u32 %v173, 4294901760
  %698 = vmatmul.f32.gmra.mxu0 %v697
  %v699 = vpop.f32.mrf.mxu0
  %v700 = vadd.f32 %v606, %v699
  %v701 = vand.u32 %v176, 4294901760
  %702 = vmatmul.f32.gmra.mxu0 %v701
  %v703 = vpop.f32.mrf.mxu0
  %v704 = vadd.f32 %v612, %v703
  %v705 = vand.u32 %v179, 4294901760
  %706 = vmatmul.f32.gmra.mxu0 %v705
  %v707 = vpop.f32.mrf.mxu0
  %v708 = vadd.f32 %v618, %v707
  %v709 = vand.u32 %v182, 4294901760
  %710 = vmatmul.f32.gmra.mxu0 %v709
  %v711 = vpop.f32.mrf.mxu0
  %v712 = vadd.f32 %v624, %v711
  %v713 = vand.u32 %v185, 4294901760
  %714 = vmatmul.f32.gmra.mxu0 %v713
  %v715 = vpop.f32.mrf.mxu0
  %v716 = vadd.f32 %v630, %v715
  %v717 = vand.u32 %v188, 4294901760
  %718 = vmatmul.f32.gmra.mxu0 %v717
  %v719 = vpop.f32.mrf.mxu0
  %v720 = vadd.f32 %v636, %v719
  %721 = vdwg.mxu0
  %722 = vmatpush.msra.mxu0 0.0
  %723 = vmatpush.msra.mxu0 0.0
  %724 = vmatpush.msra.mxu0 0.0
  %725 = vmatpush.msra.mxu0 0.0
  %726 = vmatpush.msra.mxu0 0.0
  %727 = vmatpush.msra.mxu0 0.0
  %728 = vmatpush.msra.mxu0 0.0
  %729 = vmatpush.msra.mxu0 0.0
  %730 = vmatpush.msra.mxu0 0.0
  %731 = vmatpush.msra.mxu0 0.0
  %732 = vmatpush.msra.mxu0 0.0
  %733 = vmatpush.msra.mxu0 0.0
  %734 = vmatpush.msra.mxu0 0.0
  %735 = vmatpush.msra.mxu0 0.0
  %736 = vmatpush.msra.mxu0 0.0
  %v737 = vand.u32 %v191, 4294901760
  %738 = vmatpush.msra.mxu0 %v737
  %v739 = vand.u32 %v143, 4294901760
  %740 = vmatmul.f32.gmra.mxu0 %v739
  %v741 = vpop.f32.mrf.mxu0
  %v742 = vadd.f32 %v660, %v741
  %v743 = vand.u32 %v146, 4294901760
  %744 = vmatmul.f32.gmra.mxu0 %v743
  %v745 = vpop.f32.mrf.mxu0
  %v746 = vadd.f32 %v664, %v745
  %v747 = vand.u32 %v149, 4294901760
  %748 = vmatmul.f32.gmra.mxu0 %v747
  %v749 = vpop.f32.mrf.mxu0
  %v750 = vadd.f32 %v668, %v749
  %v751 = vand.u32 %v152, 4294901760
  %752 = vmatmul.f32.gmra.mxu0 %v751
  %v753 = vpop.f32.mrf.mxu0
  %v754 = vadd.f32 %v672, %v753
  %v755 = vand.u32 %v155, 4294901760
  %756 = vmatmul.f32.gmra.mxu0 %v755
  %v757 = vpop.f32.mrf.mxu0
  %v758 = vadd.f32 %v676, %v757
  %v759 = vand.u32 %v158, 4294901760
  %760 = vmatmul.f32.gmra.mxu0 %v759
  %v761 = vpop.f32.mrf.mxu0
  %v762 = vadd.f32 %v680, %v761
  %v763 = vand.u32 %v161, 4294901760
  %764 = vmatmul.f32.gmra.mxu0 %v763
  %v765 = vpop.f32.mrf.mxu0
  %v766 = vadd.f32 %v684, %v765
  %v767 = vand.u32 %v164, 4294901760
  %768 = vmatmul.f32.gmra.mxu0 %v767
  %v769 = vpop.f32.mrf.mxu0
  %v770 = vadd.f32 %v688, %v769
  %v771 = vand.u32 %v167, 4294901760
  %772 = vmatmul.f32.gmra.mxu0 %v771
  %v773 = vpop.f32.mrf.mxu0
  %v774 = vadd.f32 %v692, %v773
  %v775 = vand.u32 %v170, 4294901760
  %776 = vmatmul.f32.gmra.mxu0 %v775
  %v777 = vpop.f32.mrf.mxu0
  %v778 = vadd.f32 %v696, %v777
  %v779 = vand.u32 %v173, 4294901760
  %780 = vmatmul.f32.gmra.mxu0 %v779
  %v781 = vpop.f32.mrf.mxu0
  %v782 = vadd.f32 %v700, %v781
  %v783 = vand.u32 %v176, 4294901760
  %784 = vmatmul.f32.gmra.mxu0 %v783
  %v785 = vpop.f32.mrf.mxu0
  %v786 = vadd.f32 %v704, %v785
  %v787 = vand.u32 %v179, 4294901760
  %788 = vmatmul.f32.gmra.mxu0 %v787
  %v789 = vpop.f32.mrf.mxu0
  %v790 = vadd.f32 %v708, %v789
  %v791 = vand.u32 %v182, 4294901760
  %792 = vmatmul.f32.gmra.mxu0 %v791
  %v793 = vpop.f32.mrf.mxu0
  %v794 = vadd.f32 %v712, %v793
  %v795 = vand.u32 %v185, 4294901760
  %796 = vmatmul.f32.gmra.mxu0 %v795
  %v797 = vpop.f32.mrf.mxu0
  %v798 = vadd.f32 %v716, %v797
  %v799 = vand.u32 %v188, 4294901760
  %800 = vmatmul.f32.gmra.mxu0 %v799
  %v801 = vpop.f32.mrf.mxu0
  %v802 = vadd.f32 %v720, %v801
  %803 = vdwg.mxu0
  %v804 = vadd.f32 %v71, %v125
  %v805 = vadd.f32 %v74, %v125
  %v806 = vadd.f32 %v77, %v125
  %v807 = vadd.f32 %v80, %v125
  %v808 = vadd.f32 %v83, %v125
  %v809 = vadd.f32 %v86, %v125
  %v810 = vadd.f32 %v89, %v125
  %v811 = vadd.f32 %v92, %v125
  %v812 = vadd.f32 %v95, %v125
  %v813 = vadd.f32 %v98, %v125
  %v814 = vadd.f32 %v101, %v125
  %v815 = vadd.f32 %v104, %v125
  %v816 = vadd.f32 %v107, %v125
  %v817 = vadd.f32 %v110, %v125
  %v818 = vadd.f32 %v113, %v125
  %v819 = vadd.f32 %v116, %v125
  %v820 = vadd.f32 %v804, %v742
  %v821 = vadd.f32 %v805, %v746
  %v822 = vadd.f32 %v806, %v750
  %v823 = vadd.f32 %v807, %v754
  %v824 = vadd.f32 %v808, %v758
  %v825 = vadd.f32 %v809, %v762
  %v826 = vadd.f32 %v810, %v766
  %v827 = vadd.f32 %v811, %v770
  %v828 = vadd.f32 %v812, %v774
  %v829 = vadd.f32 %v813, %v778
  %v830 = vadd.f32 %v814, %v782
  %v831 = vadd.f32 %v815, %v786
  %v832 = vadd.f32 %v816, %v790
  %v833 = vadd.f32 %v817, %v794
  %v834 = vadd.f32 %v818, %v798
  %v835 = vadd.f32 %v819, %v802
  %836 = vmin.xlane.f32.xlu0 %v820
  %v837 = vpop.xlane.xlu0 %836
  %838 = vmin.xlane.f32.xlu0 %v821
  %v839 = vpop.xlane.xlu0 %838
  %840 = vmin.xlane.f32.xlu0 %v822
  %v841 = vpop.xlane.xlu0 %840
  %842 = vmin.xlane.f32.xlu0 %v823
  %v843 = vpop.xlane.xlu0 %842
  %844 = vmin.xlane.f32.xlu0 %v824
  %v845 = vpop.xlane.xlu0 %844
  %846 = vmin.xlane.f32.xlu0 %v825
  %v847 = vpop.xlane.xlu0 %846
  %848 = vmin.xlane.f32.xlu0 %v826
  %v849 = vpop.xlane.xlu0 %848
  %850 = vmin.xlane.f32.xlu0 %v827
  %v851 = vpop.xlane.xlu0 %850
  %852 = vmin.xlane.f32.xlu0 %v828
  %v853 = vpop.xlane.xlu0 %852
  %854 = vmin.xlane.f32.xlu0 %v829
  %v855 = vpop.xlane.xlu0 %854
  %856 = vmin.xlane.f32.xlu0 %v830
  %v857 = vpop.xlane.xlu0 %856
  %858 = vmin.xlane.f32.xlu0 %v831
  %v859 = vpop.xlane.xlu0 %858
  %860 = vmin.xlane.f32.xlu0 %v832
  %v861 = vpop.xlane.xlu0 %860
  %862 = vmin.xlane.f32.xlu0 %v833
  %v863 = vpop.xlane.xlu0 %862
  %864 = vmin.xlane.f32.xlu0 %v834
  %v865 = vpop.xlane.xlu0 %864
  %866 = vmin.xlane.f32.xlu0 %v835
  %v867 = vpop.xlane.xlu0 %866
  %v868 = vld [vmem:[#allocation2] sm:$0xff]
  %v869 = vld [vmem:[#allocation2 + $0x8] sm:$0xff]
  %v870 = vld [vmem:[#allocation2 + $0x10] sm:$0xff]
  %v871 = vld [vmem:[#allocation2 + $0x18] sm:$0xff]
  %v872 = vld [vmem:[#allocation2 + $0x20] sm:$0xff]
  %v873 = vld [vmem:[#allocation2 + $0x28] sm:$0xff]
  %v874 = vld [vmem:[#allocation2 + $0x30] sm:$0xff]
  %v875 = vld [vmem:[#allocation2 + $0x38] sm:$0xff]
  %v876 = vld [vmem:[#allocation2 + $0x40] sm:$0xff]
  %v877 = vld [vmem:[#allocation2 + $0x48] sm:$0xff]
  %v878 = vld [vmem:[#allocation2 + $0x50] sm:$0xff]
  %v879 = vld [vmem:[#allocation2 + $0x58] sm:$0xff]
  %v880 = vld [vmem:[#allocation2 + $0x60] sm:$0xff]
  %v881 = vld [vmem:[#allocation2 + $0x68] sm:$0xff]
  %v882 = vld [vmem:[#allocation2 + $0x70] sm:$0xff]
  %v883 = vld [vmem:[#allocation2 + $0x78] sm:$0xff]
  %v884 = vmin.f32 %v868, %v837
  %v885 = vmin.f32 %v869, %v839
  %v886 = vmin.f32 %v870, %v841
  %v887 = vmin.f32 %v871, %v843
  %v888 = vmin.f32 %v872, %v845
  %v889 = vmin.f32 %v873, %v847
  %v890 = vmin.f32 %v874, %v849
  %v891 = vmin.f32 %v875, %v851
  %v892 = vmin.f32 %v876, %v853
  %v893 = vmin.f32 %v877, %v855
  %v894 = vmin.f32 %v878, %v857
  %v895 = vmin.f32 %v879, %v859
  %v896 = vmin.f32 %v880, %v861
  %v897 = vmin.f32 %v881, %v863
  %v898 = vmin.f32 %v882, %v865
  %v899 = vmin.f32 %v883, %v867
  %vm900 = vcmask 7168
  %901 = vst.msk [vmem:[#allocation2] sm:$0xff] %vm900, %v884
  %902 = vst.msk [vmem:[#allocation2 + $0x8] sm:$0xff] %vm900, %v885
  %903 = vst.msk [vmem:[#allocation2 + $0x10] sm:$0xff] %vm900, %v886
  %904 = vst.msk [vmem:[#allocation2 + $0x18] sm:$0xff] %vm900, %v887
  %905 = vst.msk [vmem:[#allocation2 + $0x20] sm:$0xff] %vm900, %v888
  %906 = vst.msk [vmem:[#allocation2 + $0x28] sm:$0xff] %vm900, %v889
  %907 = vst.msk [vmem:[#allocation2 + $0x30] sm:$0xff] %vm900, %v890
  %908 = vst.msk [vmem:[#allocation2 + $0x38] sm:$0xff] %vm900, %v891
  %909 = vst.msk [vmem:[#allocation2 + $0x40] sm:$0xff] %vm900, %v892
  %910 = vst.msk [vmem:[#allocation2 + $0x48] sm:$0xff] %vm900, %v893
  %911 = vst.msk [vmem:[#allocation2 + $0x50] sm:$0xff] %vm900, %v894
  %912 = vst.msk [vmem:[#allocation2 + $0x58] sm:$0xff] %vm900, %v895
  %913 = vst.msk [vmem:[#allocation2 + $0x60] sm:$0xff] %vm900, %v896
  %914 = vst.msk [vmem:[#allocation2 + $0x68] sm:$0xff] %vm900, %v897
  %915 = vst.msk [vmem:[#allocation2 + $0x70] sm:$0xff] %vm900, %v898
  %916 = vst.msk [vmem:[#allocation2 + $0x78] sm:$0xff] %vm900, %v899
  // Predicated region
  $region14: #{_lambda_.1} parent=0 // pred_check
    %p917 = pneg %p14
  $region15: #{_lambda_.1} parent=0 // pred_check_branch
    %919 = sbr.rel (%p917) target = $region17
  $region16: #{_lambda_.1} parent=0 // pred_region
    %v920 = vld [vmem:[#allocation2] sm:$0xff]
    %v921 = vld [vmem:[#allocation2 + $0x8] sm:$0xff]
    %v922 = vld [vmem:[#allocation2 + $0x10] sm:$0xff]
    %v923 = vld [vmem:[#allocation2 + $0x18] sm:$0xff]
    %v924 = vld [vmem:[#allocation2 + $0x20] sm:$0xff]
    %v925 = vld [vmem:[#allocation2 + $0x28] sm:$0xff]
    %v926 = vld [vmem:[#allocation2 + $0x30] sm:$0xff]
    %v927 = vld [vmem:[#allocation2 + $0x38] sm:$0xff]
    %v928 = vld [vmem:[#allocation2 + $0x40] sm:$0xff]
    %v929 = vld [vmem:[#allocation2 + $0x48] sm:$0xff]
    %v930 = vld [vmem:[#allocation2 + $0x50] sm:$0xff]
    %v931 = vld [vmem:[#allocation2 + $0x58] sm:$0xff]
    %v932 = vld [vmem:[#allocation2 + $0x60] sm:$0xff]
    %v933 = vld [vmem:[#allocation2 + $0x68] sm:$0xff]
    %v934 = vld [vmem:[#allocation2 + $0x70] sm:$0xff]
    %v935 = vld [vmem:[#allocation2 + $0x78] sm:$0xff]
    %v936 = vmax.f32 %v920, 0.0
    %v937 = vmax.f32 %v921, 0.0
    %v938 = vmax.f32 %v922, 0.0
    %v939 = vmax.f32 %v923, 0.0
    %v940 = vmax.f32 %v924, 0.0
    %v941 = vmax.f32 %v925, 0.0
    %v942 = vmax.f32 %v926, 0.0
    %v943 = vmax.f32 %v927, 0.0
    %v944 = vmax.f32 %v928, 0.0
    %v945 = vmax.f32 %v929, 0.0
    %v946 = vmax.f32 %v930, 0.0
    %v947 = vmax.f32 %v931, 0.0
    %v948 = vmax.f32 %v932, 0.0
    %v949 = vmax.f32 %v933, 0.0
    %v950 = vmax.f32 %v934, 0.0
    %v951 = vmax.f32 %v935, 0.0
    %v952 = vmin.f32 %v936, 16.0
    %v953 = vmin.f32 %v937, 16.0
    %v954 = vmin.f32 %v938, 16.0
    %v955 = vmin.f32 %v939, 16.0
    %v956 = vmin.f32 %v940, 16.0
    %v957 = vmin.f32 %v941, 16.0
    %v958 = vmin.f32 %v942, 16.0
    %v959 = vmin.f32 %v943, 16.0
    %v960 = vmin.f32 %v944, 16.0
    %v961 = vmin.f32 %v945, 16.0
    %v962 = vmin.f32 %v946, 16.0
    %v963 = vmin.f32 %v947, 16.0
    %v964 = vmin.f32 %v948, 16.0
    %v965 = vmin.f32 %v949, 16.0
    %v966 = vmin.f32 %v950, 16.0
    %v967 = vmin.f32 %v951, 16.0
    %v968 = vmul.f32 %v952, 0.0625
    %v969 = vmul.f32 %v953, 0.0625
    %v970 = vmul.f32 %v954, 0.0625
    %v971 = vmul.f32 %v955, 0.0625
    %v972 = vmul.f32 %v956, 0.0625
    %v973 = vmul.f32 %v957, 0.0625
    %v974 = vmul.f32 %v958, 0.0625
    %v975 = vmul.f32 %v959, 0.0625
    %v976 = vmul.f32 %v960, 0.0625
    %v977 = vmul.f32 %v961, 0.0625
    %v978 = vmul.f32 %v962, 0.0625
    %v979 = vmul.f32 %v963, 0.0625
    %v980 = vmul.f32 %v964, 0.0625
    %v981 = vmul.f32 %v965, 0.0625
    %v982 = vmul.f32 %v966, 0.0625
    %v983 = vmul.f32 %v967, 0.0625
    %v984 = vsub.f32 1.0, %v968
    %v985 = vsub.f32 1.0, %v969
    %v986 = vsub.f32 1.0, %v970
    %v987 = vsub.f32 1.0, %v971
    %v988 = vsub.f32 1.0, %v972
    %v989 = vsub.f32 1.0, %v973
    %v990 = vsub.f32 1.0, %v974
    %v991 = vsub.f32 1.0, %v975
    %v992 = vsub.f32 1.0, %v976
    %v993 = vsub.f32 1.0, %v977
    %v994 = vsub.f32 1.0, %v978
    %v995 = vsub.f32 1.0, %v979
    %v996 = vsub.f32 1.0, %v980
    %v997 = vsub.f32 1.0, %v981
    %v998 = vsub.f32 1.0, %v982
    %v999 = vsub.f32 1.0, %v983
    %v1000 = vlaneseq
    %v1001 = vshrl.u32 %v1000, 7
    %v1002 = vadd.s32 %v1001, 8
    %v1003 = vadd.s32 %v1001, 16
    %v1004 = vadd.s32 %v1001, 24
    %v1005 = vadd.s32 %v1001, 32
    %v1006 = vadd.s32 %v1001, 40
    %v1007 = vadd.s32 %v1001, 48
    %v1008 = vadd.s32 %v1001, 56
    %v1009 = vadd.s32 %v1001, 64
    %v1010 = vadd.s32 %v1001, 72
    %v1011 = vadd.s32 %v1001, 80
    %v1012 = vadd.s32 %v1001, 88
    %v1013 = vadd.s32 %v1001, 96
    %v1014 = vadd.s32 %v1001, 104
    %v1015 = vadd.s32 %v1001, 112
    %v1016 = vadd.s32 %v1001, 120
    %v1017 = vstv %s13
    %v1018 = vadd.s32 %v1001, %v1017
    %v1019 = vadd.s32 %v1002, %v1017
    %v1020 = vadd.s32 %v1003, %v1017
    %v1021 = vadd.s32 %v1004, %v1017
    %v1022 = vadd.s32 %v1005, %v1017
    %v1023 = vadd.s32 %v1006, %v1017
    %v1024 = vadd.s32 %v1007, %v1017
    %v1025 = vadd.s32 %v1008, %v1017
    %v1026 = vadd.s32 %v1009, %v1017
    %v1027 = vadd.s32 %v1010, %v1017
    %v1028 = vadd.s32 %v1011, %v1017
    %v1029 = vadd.s32 %v1012, %v1017
    %v1030 = vadd.s32 %v1013, %v1017
    %v1031 = vadd.s32 %v1014, %v1017
    %v1032 = vadd.s32 %v1015, %v1017
    %v1033 = vadd.s32 %v1016, %v1017
    %s1034 = sld [smem:[#allocation4]]
    %v1035 = vstv %s1034
    %vm1036 = vcmp.lt.s32.totalorder %v1018, %v1035
    %vm1037 = vcmp.lt.s32.totalorder %v1019, %v1035
    %vm1038 = vcmp.lt.s32.totalorder %v1020, %v1035
    %vm1039 = vcmp.lt.s32.totalorder %v1021, %v1035
    %vm1040 = vcmp.lt.s32.totalorder %v1022, %v1035
    %vm1041 = vcmp.lt.s32.totalorder %v1023, %v1035
    %vm1042 = vcmp.lt.s32.totalorder %v1024, %v1035
    %vm1043 = vcmp.lt.s32.totalorder %v1025, %v1035
    %vm1044 = vcmp.lt.s32.totalorder %v1026, %v1035
    %vm1045 = vcmp.lt.s32.totalorder %v1027, %v1035
    %vm1046 = vcmp.lt.s32.totalorder %v1028, %v1035
    %vm1047 = vcmp.lt.s32.totalorder %v1029, %v1035
    %vm1048 = vcmp.lt.s32.totalorder %v1030, %v1035
    %vm1049 = vcmp.lt.s32.totalorder %v1031, %v1035
    %vm1050 = vcmp.lt.s32.totalorder %v1032, %v1035
    %vm1051 = vcmp.lt.s32.totalorder %v1033, %v1035
    %v1052 = vsel %vm1036, %v984, 0.0
    %v1053 = vsel %vm1037, %v985, 0.0
    %v1054 = vsel %vm1038, %v986, 0.0
    %v1055 = vsel %vm1039, %v987, 0.0
    %v1056 = vsel %vm1040, %v988, 0.0
    %v1057 = vsel %vm1041, %v989, 0.0
    %v1058 = vsel %vm1042, %v990, 0.0
    %v1059 = vsel %vm1043, %v991, 0.0
    %v1060 = vsel %vm1044, %v992, 0.0
    %v1061 = vsel %vm1045, %v993, 0.0
    %v1062 = vsel %vm1046, %v994, 0.0
    %v1063 = vsel %vm1047, %v995, 0.0
    %v1064 = vsel %vm1048, %v996, 0.0
    %v1065 = vsel %vm1049, %v997, 0.0
    %v1066 = vsel %vm1050, %v998, 0.0
    %v1067 = vsel %vm1051, %v999, 0.0
    %v1068 = vsel %vm900, %v1052, 0.0
    %v1069 = vsel %vm900, %v1053, 0.0
    %v1070 = vadd.f32 %v1068, %v1069
    %v1071 = vsel %vm900, %v1054, 0.0
    %v1072 = vadd.f32 %v1070, %v1071
    %v1073 = vsel %vm900, %v1055, 0.0
    %v1074 = vadd.f32 %v1072, %v1073
    %v1075 = vsel %vm900, %v1056, 0.0
    %v1076 = vadd.f32 %v1074, %v1075
    %v1077 = vsel %vm900, %v1057, 0.0
    %v1078 = vadd.f32 %v1076, %v1077
    %v1079 = vsel %vm900, %v1058, 0.0
    %v1080 = vadd.f32 %v1078, %v1079
    %v1081 = vsel %vm900, %v1059, 0.0
    %v1082 = vadd.f32 %v1080, %v1081
    %v1083 = vsel %vm900, %v1060, 0.0
    %v1084 = vadd.f32 %v1082, %v1083
    %v1085 = vsel %vm900, %v1061, 0.0
    %v1086 = vadd.f32 %v1084, %v1085
    %v1087 = vsel %vm900, %v1062, 0.0
    %v1088 = vadd.f32 %v1086, %v1087
    %v1089 = vsel %vm900, %v1063, 0.0
    %v1090 = vadd.f32 %v1088, %v1089
    %v1091 = vsel %vm900, %v1064, 0.0
    %v1092 = vadd.f32 %v1090, %v1091
    %v1093 = vsel %vm900, %v1065, 0.0
    %v1094 = vadd.f32 %v1092, %v1093
    %v1095 = vsel %vm900, %v1066, 0.0
    %v1096 = vadd.f32 %v1094, %v1095
    %v1097 = vsel %vm900, %v1067, 0.0
    %v1098 = vadd.f32 %v1096, %v1097
    %1099 = vadd.xlane.f32.xlu0 %v1098
    %v1100 = vpop.xlane.xlu0 %1099
    %v1101 = vrot.slane %v1100, 4
    %v1102 = vadd.f32 %v1100, %v1101
    %v1103 = vrot.slane %v1102, 2
    %v1104 = vadd.f32 %v1102, %v1103
    %v1105 = vrot.slane %v1104, 1
    %v1106 = vadd.f32 %v1104, %v1105
    %s1107 = vtos %v1106
    %v1108 = vlaneseq
    %v1109 = vand.u32 %v1108, 127
    %vm1110 = vcmp.eq.s32.totalorder %v1001, 0
    %vm1111 = vcmp.eq.s32.totalorder %v1109, 0
    %vm1112 = vmand %vm1110, %vm1111
    %v1113 = vstv %s1107
    %v1114 = vsel %vm1112, %v1113, 0.0
    %1115 = vst [vmem:[%s3] sm:$0xff] %v1114
  $region17: #{_lambda_.1} parent=0 // pred_fallthru
    _
  // Predicated region
  $region18: #{_lambda_.1} parent=0 // pred_check
    _
  $region19: #{_lambda_.1} parent=0 // pred_check_branch
    %1117 = sbr.rel (0) target = $region21
  $region20: #{_lambda_.1} parent=0 // pred_region
    _
  $region21: #{_lambda_.1} parent=0 // pred_fallthru
    _
  // Predicated region
  $region22: #{_lambda_.1} parent=0 // pred_check
    _
  $region23: #{_lambda_.1} parent=0 // pred_check_branch
    %1119 = sbr.rel (0) target = $region25
  $region24: #{_lambda_.1} parent=0 // pred_region
    _
  $region25: #{_lambda_.1} parent=0 // pred_fallthru
    _

</llo_original>
